<compile_context>
chip_gen: v7x
topology: tpu7x:2x2x1
jax: 0.10.0
libtpu: 0.0.40
codegen_flags: <defaults>
</compile_context>

<pallas_src>
import functools
from math import sqrt

import jax
import jax.numpy as jnp
import numpy as np
from jax import lax
from jax.experimental import pallas as pl
from jax.experimental.pallas import tpu as pltpu


def _pick_tile(n, candidates):
    """Largest candidate that evenly divides n (all candidates are multiples of 8);
    falls back to the full extent (always legal as a block dim)."""
    for t in candidates:
        if n % t == 0:
            return t
    return n


# --------------------------------------------------------------------------
# Fused dense projections:  y_i = x @ W_i + b_i  for i in 0..n-1, one pallas_call.
# x is streamed from HBM once per row tile; each W_i / b_i stays resident in VMEM.
# --------------------------------------------------------------------------
def _proj_kernel(*refs, n_out):
    x_ref = refs[0]
    w_refs = refs[1:1 + n_out]
    b_refs = refs[1 + n_out:1 + 2 * n_out]
    o_refs = refs[1 + 2 * n_out:]
    x = x_ref[...].astype(jnp.bfloat16)                       # (TM, d_in)
    for i in range(n_out):                                    # static unroll (n<=3)
        w = w_refs[i][...].astype(jnp.bfloat16)               # (d_in, d_out_i)
        y = jnp.dot(x, w, preferred_element_type=jnp.float32)
        y = y + b_refs[i][...].astype(jnp.float32)            # (1, d_out_i) broadcasts
        o_refs[i][...] = y.astype(o_refs[i].dtype)


def fused_linear(x2d, weights, biases, out_dtypes=None):
    """x2d: (R, d_in); weights[i]: (d_in, d_out_i); biases[i]: (d_out_i,)."""
    R, d_in = x2d.shape
    n = len(weights)
    if out_dtypes is None:
        out_dtypes = [x2d.dtype] * n
    tm = _pick_tile(R, (512, 256, 128, 64, 32, 16, 8))
    in_specs = [pl.BlockSpec((tm, d_in), lambda i: (i, 0))]
    in_specs += [pl.BlockSpec(w.shape, lambda i: (0, 0)) for w in weights]
    in_specs += [pl.BlockSpec((1, w.shape[1]), lambda i: (0, 0)) for w in weights]
    out_specs = tuple(pl.BlockSpec((tm, w.shape[1]), lambda i: (i, 0)) for w in weights)
    out_shape = tuple(jax.ShapeDtypeStruct((R, w.shape[1]), dt)
                      for w, dt in zip(weights, out_dtypes))
    outs = pl.pallas_call(
        functools.partial(_proj_kernel, n_out=n),
        out_shape=out_shape,
        grid=(R // tm,),
        in_specs=in_specs,
        out_specs=out_specs,
        compiler_params=pltpu.CompilerParams(dimension_semantics=("parallel",)),
    )(x2d, *weights, *[b.reshape(1, -1) for b in biases])
    if not isinstance(outs, (list, tuple)):
        outs = (outs,)
    return list(outs)


# --------------------------------------------------------------------------
# Multi-head full (non-causal) attention; heads packed along the feature axis.
#   q: (B, L, H*dk), k: (B, S, H*dk), v: (B, S, H*dv)
#   -> context (B, L, H*dv), attention (B, H, L, S)
# --------------------------------------------------------------------------
def _mha_kernel(q_ref, k_ref, v_ref, o_ref, a_ref, *, n_heads, d_k, d_v, scale):
    # Fold the softmax scale into the small (Lt, H*dk) query tile (not (Lt, S) scores).
    q = (q_ref[0].astype(jnp.float32) * scale).astype(jnp.bfloat16)   # (Lt, H*dk)
    k = k_ref[0].astype(jnp.bfloat16)                                 # (S, H*dk)
    v = v_ref[0].astype(jnp.bfloat16)                                 # (S, H*dv)
    for h in range(n_heads):                                          # static unroll over heads
        qh = q[:, h * d_k:(h + 1) * d_k]                              # (Lt, dk)
        kh = k[:, h * d_k:(h + 1) * d_k]                              # (S, dk)
        vh = v[:, h * d_v:(h + 1) * d_v]                              # (S, dv)
        # QK^T without materializing k.T: contract the dk axes directly.
        scores = lax.dot_general(qh, kh, (((1,), (1,)), ((), ())),
                                 preferred_element_type=jnp.float32)  # (Lt, S)
        m = jnp.max(scores, axis=-1, keepdims=True)                   # f32 softmax math
        p = jnp.exp(scores - m)
        inv = pl.reciprocal(jnp.sum(p, axis=-1, keepdims=True), approx=True)
        attn = p * inv
        a_ref[0, h] = attn.astype(a_ref.dtype)
        ctx = lax.dot_general(attn.astype(jnp.bfloat16), vh,
                              (((1,), (0,)), ((), ())),
                              preferred_element_type=jnp.float32)     # (Lt, dv)
        o_ref[0, :, h * d_v:(h + 1) * d_v] = ctx.astype(o_ref.dtype)


def full_attention(q, k, v, n_heads, scale, attn_dtype=jnp.float32):
    B, L, HE = q.shape
    S = k.shape[1]
    HD = v.shape[2]
    d_k = HE // n_heads
    d_v = HD // n_heads
    lt = _pick_tile(L, (256, 128, 64, 32, 16, 8))    # query tile: bounds VMEM per step
    kernel = functools.partial(_mha_kernel, n_heads=n_heads, d_k=d_k, d_v=d_v, scale=scale)
    out, attn = pl.pallas_call(
        kernel,
        out_shape=(
            jax.ShapeDtypeStruct((B, L, HD), q.dtype),
            jax.ShapeDtypeStruct((B, n_heads, L, S), attn_dtype),
        ),
        grid=(B, L // lt),
        in_specs=[
            pl.BlockSpec((1, lt, HE), lambda b, i: (b, i, 0)),
            pl.BlockSpec((1, S, HE), lambda b, i: (b, 0, 0)),   # resident across L tiles
            pl.BlockSpec((1, S, HD), lambda b, i: (b, 0, 0)),   # resident across L tiles
        ],
        out_specs=(
            pl.BlockSpec((1, lt, HD), lambda b, i: (b, i, 0)),
            pl.BlockSpec((1, n_heads, lt, S), lambda b, i: (b, 0, i, 0)),
        ),
        compiler_params=pltpu.CompilerParams(
            dimension_semantics=("parallel", "parallel")),
    )(q, k, v)
    return out, attn


# --------------------------------------------------------------------------
# AttentionLayer: parameter init + forward
# --------------------------------------------------------------------------
def init_attention_layer(key, d_model, n_heads, d_keys=None, d_values=None,
                         dtype=jnp.float32):
    d_keys = d_keys or d_model // n_heads
    d_values = d_values or d_model // n_heads
    ks = jax.random.split(key, 8)
    def w(k, din, dout):
        return (jax.random.normal(k, (din, dout), dtype) * 0.02).astype(dtype)
    def b(k, dout):
        return (jax.random.normal(k, (dout,), dtype) * 0.02).astype(dtype)
    return {
        "n_heads": n_heads,
        "wq": w(ks[0], d_model, d_keys * n_heads),   "bq": b(ks[1], d_keys * n_heads),
        "wk": w(ks[2], d_model, d_keys * n_heads),   "bk": b(ks[3], d_keys * n_heads),
        "wv": w(ks[4], d_model, d_values * n_heads), "bv": b(ks[5], d_values * n_heads),
        "wo": w(ks[6], d_values * n_heads, d_model), "bo": b(ks[7], d_model),
    }


def attention_layer_forward(params, queries, keys, values, attn_mask=None):
    # TODO(synk): attn_mask is accepted but ignored (FullAttention(mask_flag=False)).
    B, L, _ = queries.shape
    _, S, _ = keys.shape
    H = params["n_heads"]
    wq, bq = params["wq"], params["bq"]
    wk, bk = params["wk"], params["bk"]
    wv, bv = params["wv"], params["bv"]
    bf16 = jnp.bfloat16

    if queries is keys and keys is values:
        # Self-attention: one fused QKV projection -> input read from HBM once.
        q2, k2, v2 = fused_linear(queries.reshape(B * L, -1), [wq, wk, wv],
                                  [bq, bk, bv], out_dtypes=[bf16, bf16, bf16])
    else:
        (q2,) = fused_linear(queries.reshape(B * L, -1), [wq], [bq], out_dtypes=[bf16])
        if keys is values:
            k2, v2 = fused_linear(keys.reshape(B * S, -1), [wk, wv], [bk, bv],
                                  out_dtypes=[bf16, bf16])
        else:
            (k2,) = fused_linear(keys.reshape(B * S, -1), [wk], [bk], out_dtypes=[bf16])
            (v2,) = fused_linear(values.reshape(B * S, -1), [wv], [bv], out_dtypes=[bf16])

    d_k = wq.shape[1] // H
    scale = 1.0 / sqrt(d_k)

    # Heads stay packed in the feature axis -> no (B,L,H,E) <-> (B,H,L,E) transposes.
    out, attn = full_attention(q2.reshape(B, L, -1), k2.reshape(B, S, -1),
                               v2.reshape(B, S, -1), H, scale,
                               attn_dtype=jnp.float32)

    (out,) = fused_linear(out.reshape(B * L, -1), [params["wo"]], [params["bo"]],
                          out_dtypes=[queries.dtype])
    return out.reshape(B, L, -1), attn


# --------------------------------------------------------------------------
# Pure-JAX f32 reference for correctness check
# --------------------------------------------------------------------------
def reference_forward(params, queries, keys, values):
    B, L, _ = queries.shape
    _, S, _ = keys.shape
    H = params["n_heads"]
    q = (queries @ params["wq"] + params["bq"]).reshape(B, L, H, -1)
    k = (keys    @ params["wk"] + params["bk"]).reshape(B, S, H, -1)
    v = (values  @ params["wv"] + params["bv"]).reshape(B, S, H, -1)
    E = q.shape[-1]
    scale = 1.0 / sqrt(E)
    scores = jnp.einsum("blhe,bshe->bhls", q, k) * scale
    attn = jax.nn.softmax(scores, axis=-1)
    out = jnp.einsum("bhls,bshd->blhd", attn, v).reshape(B, L, -1)
    out = out @ params["wo"] + params["bo"]
    return out, attn


if __name__ == "__main__":
    B, L, S, d_model, n_heads = 2, 8, 8, 32, 4

    key = jax.random.PRNGKey(0)
    kp, kq, kk, kv = jax.random.split(key, 4)
    params = init_attention_layer(kp, d_model, n_heads)

    queries = jax.random.normal(kq, (B, L, d_model), jnp.float32)
    keys_in = jax.random.normal(kk, (B, S, d_model), jnp.float32)
    values_in = jax.random.normal(kv, (B, S, d_model), jnp.float32)

    # Cross-attention path (separate projections).
    out, attn = attention_layer_forward(params, queries, keys_in, values_in,
                                        attn_mask=None)
    out = jax.block_until_ready(out)
    attn = jax.block_until_ready(attn)
    ref_out, ref_attn = reference_forward(params, queries, keys_in, values_in)
    # bf16 matmul operands (f32 accumulate) -> compare against the f32 reference
    # at bf16-appropriate tolerances.
    np.testing.assert_allclose(np.asarray(out), np.asarray(ref_out),
                               rtol=2e-2, atol=2e-2)
    np.testing.assert_allclose(np.asarray(attn), np.asarray(ref_attn),
                               rtol=2e-2, atol=2e-2)
    assert out.shape == (B, L, d_model)
    assert attn.shape == (B, n_heads, L, S)

    # Self-attention path (fused QKV projection in a single pallas_call).
    out_s, attn_s = attention_layer_forward(params, queries, queries, queries,
                                            attn_mask=None)
    out_s = jax.block_until_ready(out_s)
    attn_s = jax.block_until_ready(attn_s)
    ref_out_s, ref_attn_s = reference_forward(params, queries, queries, queries)
    np.testing.assert_allclose(np.asarray(out_s), np.asarray(ref_out_s),
                               rtol=2e-2, atol=2e-2)
    np.testing.assert_allclose(np.asarray(attn_s), np.asarray(ref_attn_s),
                               rtol=2e-2, atol=2e-2)

    print("KERNEL_OK")
</pallas_src>

<mosaic_0001>
module attributes {stable_mosaic.version = 11 : i64} {
  func.func @_proj_kernel(%arg0: i32, %arg1: memref<16x32xf32, #tpu.memory_space<vmem>>, %arg2: memref<32x32xf32, #tpu.memory_space<vmem>>, %arg3: memref<1x32xf32, #tpu.memory_space<vmem>>, %arg4: memref<16x32xbf16, #tpu.memory_space<vmem>>) attributes {dimension_semantics = [#tpu.dimension_semantics<parallel>], iteration_bounds = array<i64: 1>, scalar_prefetch = 0 : i64, scratch_operands = 0 : i64, tpu.core_type = #tpu.core_type<tc>, window_params = [{transform_indices = @transform_0, window_bounds = array<i64: 16, 32>}, {pipeline_mode = #tpu.pipeline_mode<synchronous>, transform_indices = @transform_1, window_bounds = array<i64: 32, 32>}, {pipeline_mode = #tpu.pipeline_mode<synchronous>, transform_indices = @transform_2, window_bounds = array<i64: 1, 32>}, {transform_indices = @transform_3, window_bounds = array<i64: 16, 32>}]} {
    %c0 = arith.constant 0 : index
    %c0_0 = arith.constant 0 : index
    %0 = vector.load %arg1[%c0, %c0_0] : memref<16x32xf32, #tpu.memory_space<vmem>>, vector<16x32xf32>
    %1 = arith.truncf %0 : vector<16x32xf32> to vector<16x32xbf16>
    %c0_1 = arith.constant 0 : index
    %c0_2 = arith.constant 0 : index
    %2 = vector.load %arg2[%c0_1, %c0_2] : memref<32x32xf32, #tpu.memory_space<vmem>>, vector<32x32xf32>
    %3 = arith.truncf %2 : vector<32x32xf32> to vector<32x32xbf16>
    %cst = arith.constant dense<0.000000e+00> : vector<16x32xf32>
    %4 = tpu.matmul %1, %3, %cst {dimension_numbers = #tpu.dot_dimension_numbers<[1], [0], [0], [1], [0, 0, 1, 1], [], []>} : vector<16x32xbf16>, vector<32x32xbf16>, vector<16x32xf32> -> vector<16x32xf32>
    %c0_3 = arith.constant 0 : index
    %c0_4 = arith.constant 0 : index
    %5 = vector.load %arg3[%c0_3, %c0_4] : memref<1x32xf32, #tpu.memory_space<vmem>>, vector<1x32xf32>
    %6 = vector.broadcast %5 : vector<1x32xf32> to vector<16x32xf32>
    %7 = arith.addf %4, %6 : vector<16x32xf32>
    %8 = arith.truncf %7 : vector<16x32xf32> to vector<16x32xbf16>
    %c0_5 = arith.constant 0 : index
    %c0_6 = arith.constant 0 : index
    %9 = vector.load %arg4[%c0_5, %c0_6] : memref<16x32xbf16, #tpu.memory_space<vmem>>, vector<16x32xbf16>
    tpu.vector_store %arg4[%c0_5, %c0_6], %8 {strides = array<i32>} : memref<16x32xbf16, #tpu.memory_space<vmem>>, vector<16x32xbf16>,
    return
  }
  func.func @transform_0(%arg0: i32) -> (i32, i32) {
    %c0_i32 = arith.constant 0 : i32
    %c0_i32_0 = arith.constant 0 : i32
    return %arg0, %c0_i32 : i32, i32
  }
  func.func @transform_1(%arg0: i32) -> (i32, i32) {
    %c0_i32 = arith.constant 0 : i32
    %c0_i32_0 = arith.constant 0 : i32
    %c0_i32_1 = arith.constant 0 : i32
    return %c0_i32, %c0_i32_0 : i32, i32
  }
  func.func @transform_2(%arg0: i32) -> (i32, i32) {
    %c0_i32 = arith.constant 0 : i32
    %c0_i32_0 = arith.constant 0 : i32
    %c0_i32_1 = arith.constant 0 : i32
    return %c0_i32, %c0_i32_0 : i32, i32
  }
  func.func @transform_3(%arg0: i32) -> (i32, i32) {
    %c0_i32 = arith.constant 0 : i32
    %c0_i32_0 = arith.constant 0 : i32
    return %arg0, %c0_i32 : i32, i32
  }
}

</mosaic_0001>

<llo_original>
// kernel: tpu_custom_call.1
$region0: #{tpu_custom_call.1}
  #allocation0 [shape = 'u32[]', space=smem, size = 0x4, offset = 0x4, fixed_abs, tag = 'smem constant byte address 0x4 - core index']
  #allocation1 [shape = 'u32[144,128]{1,0:T(1,128)}', space=vmem, size = 0x12000, scoped, tag = 'internal scratch']
  %s0 = inlined_call_operand.hbm [shape: f32[16,32], index: 0, kind: input, shape index: {}]
  %s1 = inlined_call_operand.hbm [shape: f32[32,32], index: 1, kind: input, shape index: {}]
  %s2 = inlined_call_operand.vmem [shape: f32[1,32], index: 2, kind: input, shape index: {}]
  %s3 = inlined_call_operand.hbm [shape: bf16[16,32], index: 3, kind: output, shape index: {}]
  %s4 = sld [smem:[#allocation0]]
  $region30: #{tpu_custom_call.1} parent=0
    _
  %s6 = ssub.s32 1, %s4
  %s7 = scalar_select 0, %s6, %s4
  $region1: #{tpu_custom_call.1} parent=0
    #allocation2 [shape = 'u8[8192]{0}', space=vmem, size = 0x2000, scoped, tag = 'input window, operand 0, single buffered']
    #allocation3 [shape = 's32[1]{0}', space=sflag, size = 0x4, scoped, tag = 'scoped memory for tpu_custom_call.1']
    #allocation4 [shape = 's32[1]{0}', space=sflag, size = 0x4, scoped, tag = 'scoped memory for tpu_custom_call.1']
    #allocation5 [shape = 'u8[16384]{0}', space=vmem, size = 0x4000, scoped, tag = 'input window, operand 1, single buffered']
    #allocation6 [shape = 's32[1]{0}', space=sflag, size = 0x4, scoped, tag = 'scoped memory for tpu_custom_call.1']
    #allocation7 [shape = 'u8[4096]{0}', space=vmem, size = 0x1000, scoped, tag = 'output window, operand 0, single buffered']
    %8 = vsyncpa [#allocation3], 0
    %9 = vsyncpa [#allocation6], 0
    %10 = vsyncpa [#allocation4], 0
    // Predicated region
    $region2: #{tpu_custom_call.1} parent=1 // pred_check
      _
    $region3: #{tpu_custom_call.1} parent=1 // pred_check_branch
      %12 = sbr.rel (0) target = $region5
    $region4: #{tpu_custom_call.1} parent=1 // pred_region
      %s14 = ssub.s32 256, 256
      %15 = vsyncadd [#allocation3], %s14
      %s16 = sshll.u32 [#allocation2], 4
      %s17 = int_to_ptr.vmem [resolvable:$true] %s16
      %22 = dma.hbm_to_vmem [thread:$0]  %s0, 256, %s17, [#allocation3], 128, 128, 8
    $region5: #{tpu_custom_call.1} parent=1 // pred_fallthru
      _
    // Predicated region
    $region6: #{tpu_custom_call.1} parent=1 // pred_check
      _
    $region7: #{tpu_custom_call.1} parent=1 // pred_check_branch
      %24 = sbr.rel (0) target = $region9
    $region8: #{tpu_custom_call.1} parent=1 // pred_region
      %s26 = ssub.s32 512, 512
      %27 = vsyncadd [#allocation6], %s26
      %s28 = sshll.u32 [#allocation5], 4
      %s29 = int_to_ptr.vmem [resolvable:$true] %s28
      %34 = dma.hbm_to_vmem [thread:$0]  %s1, 512, %s29, [#allocation6], 128, 128, 8
    $region9: #{tpu_custom_call.1} parent=1 // pred_fallthru
      _
    // Predicated region
    $region10: #{tpu_custom_call.1} parent=1 // pred_check
      _
    $region11: #{tpu_custom_call.1} parent=1 // pred_check_branch
      %36 = sbr.rel (0) target = $region13
    $region12: #{tpu_custom_call.1} parent=1 // pred_region
      _
    $region13: #{tpu_custom_call.1} parent=1 // pred_fallthru
      _
    // Predicated region
    $region14: #{tpu_custom_call.1} parent=1 // pred_check
      _
    $region15: #{tpu_custom_call.1} parent=1 // pred_check_branch
      %38 = sbr.rel (0) target = $region17
    $region16: #{tpu_custom_call.1} parent=1 // pred_region
      %39 = dma.done [#allocation3], 256
    $region17: #{tpu_custom_call.1} parent=1 // pred_fallthru
      _
    // Predicated region
    $region18: #{tpu_custom_call.1} parent=1 // pred_check
      _
    $region19: #{tpu_custom_call.1} parent=1 // pred_check_branch
      %41 = sbr.rel (0) target = $region21
    $region20: #{tpu_custom_call.1} parent=1 // pred_region
      %42 = dma.done [#allocation6], 512
    $region21: #{tpu_custom_call.1} parent=1 // pred_fallthru
      _
    %v44 = vld [vmem:[#allocation2] sm:$0xff]
    %v45 = vld [vmem:[#allocation2 + $0x8] sm:$0xff]
    %v46 = vpack.c.bf16 %v45, %v44
    %v47 = vld [vmem:[#allocation5] sm:$0xff]
    %v48 = vld [vmem:[#allocation5 + $0x8] sm:$0xff]
    %v49 = vld [vmem:[#allocation5 + $0x10] sm:$0xff]
    %v50 = vld [vmem:[#allocation5 + $0x18] sm:$0xff]
    %v51 = vpack.c.bf16 %v48, %v47
    %v52 = vpack.c.bf16 %v50, %v49
    %v53 = vld [vmem:[%s2] sm:$0x1]
    %v55 = vlaneseq
    %v56 = vshrl.u32 %v55, 7
    %v57 = vsub.s32 0, %v56
    %v58 = vrot.slane %v53, %v57
    %vm60 = vcmask 261120
    %v62 = vsel %vm60, %v46, 0
    %64 = vmatprep.subr.bf16.mxu0 0
    %65 = vmatpush1.bf16.msra.mxu0 %v51
    %66 = vmatprep.subr.bf16.mxu0 0
    %67 = vmatpush1.bf16.msra.mxu0 %v52
    %68 = vmatprep.subr.bf16.mxu0 0
    %69 = vmatpush1.bf16.msra.mxu0 0
    %70 = vmatprep.subr.bf16.mxu0 0
    %71 = vmatpush1.bf16.msra.mxu0 0
    %72 = vmatprep.subr.bf16.mxu0 0
    %73 = vmatpush1.bf16.msra.mxu0 0
    %74 = vmatprep.subr.bf16.mxu0 0
    %75 = vmatpush1.bf16.msra.mxu0 0
    %76 = vmatprep.subr.bf16.mxu0 0
    %77 = vmatpush1.bf16.msra.mxu0 0
    %78 = vmatprep.subr.bf16.mxu0 0
    %79 = vmatpush1.bf16.msra.mxu0 0
    %80 = vmatprep.subr.bf16.mxu0 0
    %81 = vmatpush1.bf16.msra.mxu0 0
    %82 = vmatprep.subr.bf16.mxu0 0
    %83 = vmatpush1.bf16.msra.mxu0 0
    %84 = vmatprep.subr.bf16.mxu0 0
    %85 = vmatpush1.bf16.msra.mxu0 0
    %86 = vmatprep.subr.bf16.mxu0 0
    %87 = vmatpush1.bf16.msra.mxu0 0
    %88 = vmatprep.subr.bf16.mxu0 0
    %89 = vmatpush1.bf16.msra.mxu0 0
    %90 = vmatprep.subr.bf16.mxu0 0
    %91 = vmatpush1.bf16.msra.mxu0 0
    %92 = vmatprep.subr.bf16.mxu0 0
    %93 = vmatpush1.bf16.msra.mxu0 0
    %94 = vmatprep.subr.bf16.mxu0 0
    %95 = vmatpush1.bf16.msra.mxu0 0
    %96 = vmatprep.mubr.bf16.mxu0 0
    %97 = vmatmul.mubr.bf16.gmra.mrb[0].mxu0 %v62
    %v98 = vpop.f32.mrb[0].mxu0
    %v99 = vadd.f32 %v58, %v98
    %v100 = vpop.f32.mrb[0].mxu0
    %v101 = vpop.f32.mrb[0].mxu0
    %v102 = vadd.f32 %v58, %v101
    %v103 = vpop.f32.mrb[0].mxu0
    %104 = vdwg.mxu0
    %v105 = vpack.c.bf16 %v102, %v99
    %v107 = vunpack.c.l.b16 %v105
    %v108 = vunpack.c.h.b16 %v105
    %v109 = vpack.c.b16 %v107, %v107
    %v110 = vpack.c.b16 %v108, %v108
    %vm113 = vcmask 257024
    %114 = vst.msk [vmem:[#allocation7] sm:$0xf] %vm113, %v109
    %115 = vst.msk [vmem:[#allocation7 + $0x4] sm:$0xf] %vm113, %v110
    // Predicated region
    $region22: #{tpu_custom_call.1} parent=1 // pred_check
      _
    $region23: #{tpu_custom_call.1} parent=1 // pred_check_branch
      %117 = sbr.rel (0) target = $region25
    $region24: #{tpu_custom_call.1} parent=1 // pred_region
      %s119 = ssub.s32 128, 128
      %120 = vsyncadd [#allocation4], %s119
      %s121 = sshll.u32 [#allocation7], 4
      %s122 = int_to_ptr.vmem [resolvable:$true] %s121
      %127 = dma.vmem_to_hbm [thread:$0]  %s122, 128, %s3, [#allocation4], 64, 64, 4
    $region25: #{tpu_custom_call.1} parent=1 // pred_fallthru
      _
    // Predicated region
    $region26: #{tpu_custom_call.1} parent=1 // pred_check
      _
    $region27: #{tpu_custom_call.1} parent=1 // pred_check_branch
      %129 = sbr.rel (0) target = $region29
    $region28: #{tpu_custom_call.1} parent=1 // pred_region
      %130 = dma.done [#allocation4], 128
    $region29: #{tpu_custom_call.1} parent=1 // pred_fallthru
      _
    %131 = vsyncpa [#allocation3], 1
    %132 = vsyncpa [#allocation6], 1
    %133 = vsyncpa [#allocation4], 1

</llo_original>
